<compile_context>
chip_gen: v7x
topology: tpu7x:2x2x1
jax: 0.10.0
libtpu: 0.0.40
codegen_flags: <defaults>
</compile_context>

<pallas_src>
import jax
import jax.numpy as jnp
from jax import lax
from jax.experimental import pallas as pl
from jax.experimental.pallas import tpu as pltpu


def _clora_kernel(x_ref, w_ref, xb_ref, at_ref, bias_ref, o_ref, acc_ref):
    """One (i, j, k) grid step.

    acc (tm, tn) += x_tile (tm, tk) @ W_tile (tn, tk)^T  (contract dim 1/1,
    so W is consumed in its native layout -- no XLU transpose).
    At the last k step: out = acc + xb_tile (tm, r) @ At_tile (r, tn) + bias.
    """
    k = pl.program_id(2)

    @pl.when(k == 0)
    def _():
        acc_ref[...] = jnp.zeros_like(acc_ref)

    acc_ref[...] += lax.dot_general(
        x_ref[...], w_ref[...],
        dimension_numbers=(((1,), (1,)), ((), ())),
        preferred_element_type=jnp.float32,
    )

    @pl.when(k == pl.num_programs(2) - 1)
    def _():
        lora = jnp.dot(xb_ref[...], at_ref[...],
                       preferred_element_type=jnp.float32)
        o_ref[...] = (acc_ref[...] + lora
                      + bias_ref[...].astype(jnp.float32)).astype(o_ref.dtype)


def _round_up(x, m):
    return ((x + m - 1) // m) * m


def _sublane_quantum(dtype):
    """Second-minor packing quantum: f32 -> 8, bf16 -> 16, int8/fp8 -> 32."""
    itemsize = jnp.dtype(dtype).itemsize
    return max(8, 8 * (4 // itemsize))


def _pick_tile(dim, preferred, quantum):
    """Return (tile, padded_dim): tile divides padded_dim, tile % quantum == 0,
    or tile == padded_dim == dim (full-extent layout exemption, bounded size)."""
    for cand in (preferred, 1024, 512, 256, 128, quantum):
        cand = min(cand, dim)
        if cand >= quantum and cand % quantum == 0 and dim % cand == 0:
            return cand, dim
    if dim <= 4096:
        # Full-extent block is layout-exempt and small enough for VMEM.
        return dim, dim
    # Large awkward dim: pad it up to the quantum and tile the padded extent.
    padded = _round_up(dim, quantum)
    for cand in (preferred, 1024, 512, 256, 128, quantum):
        cand = min(cand, padded)
        if cand % quantum == 0 and padded % cand == 0:
            return cand, padded
    return quantum, padded


def _tile_defaults():
    """Per-generation (tm, tn, tk) defaults (clamped to problem size later)."""
    try:
        kind = jax.devices()[0].device_kind.lower()
    except Exception:
        kind = ""
    if "v7" in kind:
        # v7x: ~310 flops/byte crossover but only 64 MiB VMEM/TC and 2 TCs:
        # moderate tiles, keep (M/tm)*(N/tn) >= 2 for megacore sharding.
        return 512, 1024, 1024
    if "v5 lite" in kind or "v5e" in kind or "v5lite" in kind:
        # v5e: ~240 flops/byte crossover; big tk cuts f32 accumulator RMW
        # traffic (single vector-store slot).
        return 512, 512, 1024
    # v6e (and default): highest crossover (~650 flops/byte) -> big output tiles.
    return 1024, 1024, 1024


def clora_linear(x, weight, A, B, bias, *, alpha=32, r=None,
                 tm=None, tn=None, tk=None, compute_dtype=None):
    """x: (..., in_features) -> (..., out_features).

    compute_dtype: optional dtype (e.g. jnp.bfloat16) for the MXU operands;
    accumulation is always float32.  None keeps the inputs' native dtypes
    (exactly matching the PyTorch forward).
    """
    orig_shape = x.shape
    in_features = orig_shape[-1]
    out_features = weight.shape[0]

    assert A.shape[0] == out_features and B.shape[0] == in_features
    assert A.shape[1] == B.shape[1], "A and B must share the LoRA rank"
    r_dim = A.shape[1]
    if r is None:
        r = r_dim
    assert r == r_dim, "hyperparameter r must match A.shape[1]"
    scale = float(alpha) / float(r)

    out_dtype = x.dtype
    x2d = x.reshape(-1, in_features)
    M, K = x2d.shape
    N = out_features

    # Optionally feed the MXU narrow operands (bf16); accumulation stays f32.
    if compute_dtype is not None:
        x_c = x2d.astype(compute_dtype)
        w_c = weight.astype(compute_dtype)
        a_c = A.astype(compute_dtype)
        b_c = B.astype(compute_dtype)
    else:
        x_c, w_c, a_c, b_c = x2d, weight, A, B

    # LoRA side product hoisted out of the kernel: xb = (x @ B) * scale is
    # j-invariant; computing it once here removes the redundant (tm,tk)@(tk,r)
    # MXU pushes per k-step and the xb scratch read-modify-write traffic.
    xb = (jnp.dot(x_c, b_c, preferred_element_type=jnp.float32)
          * scale).astype(a_c.dtype)
    at = a_c.T                                       # (r, N): lane-dense epilogue

    bias_arr = bias if bias is not None else jnp.zeros((N,), out_dtype)
    bias2d = bias_arr.reshape(1, N)

    # --- tile selection (dtype-aware quanta, per-generation defaults) ---
    d_tm, d_tn, d_tk = _tile_defaults()
    tm = d_tm if tm is None else tm
    tn = d_tn if tn is None else tn
    tk = d_tk if tk is None else tk

    m_quantum = max(_sublane_quantum(x_c.dtype), _sublane_quantum(out_dtype))
    tm = min(tm, _round_up(M, m_quantum))
    tm = _round_up(tm, m_quantum)
    tn, N_pad = _pick_tile(N, tn, 128)
    tk, K_pad = _pick_tile(K, tk, 128)

    # Rare odd-size padding (zeros do not change the result).
    if K_pad != K:
        x_c = jnp.pad(x_c, ((0, 0), (0, K_pad - K)))
        w_c = jnp.pad(w_c, ((0, 0), (0, K_pad - K)))
    if N_pad != N:
        w_c = jnp.pad(w_c, ((0, N_pad - N), (0, 0)))
        at = jnp.pad(at, ((0, 0), (0, N_pad - N)))
        bias2d = jnp.pad(bias2d, ((0, 0), (0, N_pad - N)))

    # No pad/copy of x along M: the last (partial) M block is masked by Pallas.
    grid = (pl.cdiv(M, tm), N_pad // tn, K_pad // tk)

    nb = lambda a: a.size * jnp.dtype(a.dtype).itemsize
    in_b = jnp.dtype(x_c.dtype).itemsize
    w_b = jnp.dtype(w_c.dtype).itemsize
    o_b = jnp.dtype(out_dtype).itemsize
    # Double-buffered inputs/outputs + f32 accumulator.
    vmem_need = (2 * (tm * tk * in_b + tn * tk * w_b + tm * r_dim * in_b
                      + r_dim * tn * w_b + tn * w_b)
                 + 2 * tm * tn * o_b + tm * tn * 4)
    try:
        is_v7 = "v7" in jax.devices()[0].device_kind.lower()
    except Exception:
        is_v7 = False
    vmem_cap = (56 if is_v7 else 100) * 1024 * 1024
    vmem_limit = int(min(max(vmem_need * 3 // 2, 32 * 1024 * 1024), vmem_cap))

    cost = pl.CostEstimate(
        flops=2 * M * N_pad * K_pad + 2 * M * N_pad * r_dim,
        transcendentals=0,
        bytes_accessed=(nb(x_c) + nb(w_c) + nb(xb) + nb(at) + nb(bias2d)
                        + M * N_pad * o_b),
    )

    # TODO(synk): optional pipeline_mode=pl.Buffered(3) on x/W for v5e if DMA is
    # still exposed after the tile enlargement; left at the default depth here.
    out2d = pl.pallas_call(
        _clora_kernel,
        out_shape=jax.ShapeDtypeStruct((M, N_pad), out_dtype),
        grid_spec=pltpu.PrefetchScalarGridSpec(
            num_scalar_prefetch=0,
            grid=grid,
            in_specs=[
                pl.BlockSpec((tm, tk), lambda i, j, k: (i, k)),       # x
                pl.BlockSpec((tn, tk), lambda i, j, k: (j, k)),       # W (native layout)
                pl.BlockSpec((tm, r_dim), lambda i, j, k: (i, 0)),    # (x @ B) * scale
                pl.BlockSpec((r_dim, tn), lambda i, j, k: (0, j)),    # A^T
                pl.BlockSpec((1, tn), lambda i, j, k: (0, j)),        # bias
            ],
            out_specs=pl.BlockSpec((tm, tn), lambda i, j, k: (i, j)),
            scratch_shapes=[pltpu.VMEM((tm, tn), jnp.float32)],       # f32 accumulator
        ),
        compiler_params=pltpu.CompilerParams(
            dimension_semantics=("parallel", "parallel", "arbitrary"),
            vmem_limit_bytes=vmem_limit,
        ),
        cost_estimate=cost,
    )(x_c, w_c, xb, at, bias2d)

    if N_pad != N:
        out2d = out2d[:, :N]
    return out2d.reshape(*orig_shape[:-1], N)


if __name__ == "__main__":
    # Small shapes consistent with the module: batch=2, seq=8, hidden=in=128, out=128.
    in_features, out_features, r, alpha = 128, 128, 32, 32
    batch, seq = 2, 8

    key = jax.random.PRNGKey(0)
    k_x, k_w, k_a, k_b, k_bias = jax.random.split(key, 5)

    x = jax.random.normal(k_x, (batch, seq, in_features), dtype=jnp.float32)
    weight = jax.random.normal(k_w, (out_features, in_features), dtype=jnp.float32) * 0.02
    A = jax.random.normal(k_a, (out_features, r), dtype=jnp.float32) * 0.01
    # B is zero-initialized in the module; use a small random value so the LoRA
    # path is actually exercised numerically (deterministic, in-script).
    B = jax.random.normal(k_b, (in_features, r), dtype=jnp.float32) * 0.01
    bias = jax.random.normal(k_bias, (out_features,), dtype=jnp.float32) * 0.1

    # TODO(synk): orthogonal_loss() (and the P_A/P_B fp16 orthogonal buffers) is
    # not part of forward(); not implemented in the kernel.

    # Pure-JAX reference (mirrors the PyTorch forward).
    delta_w = (A @ B.T) * (alpha / r)
    y_ref = x @ (weight + delta_w).T + bias

    # 1) Native-dtype (f32) path — matches the module's forward semantics.
    y = clora_linear(x, weight, A, B, bias, alpha=alpha, r=r)
    y = jax.block_until_ready(y)
    assert jnp.allclose(y, y_ref, atol=1e-4, rtol=1e-4), "f32 mismatch vs reference"

    # 2) bf16-fed MXU path (f32 accumulation) — loose tolerance.
    y_bf = clora_linear(x, weight, A, B, bias, alpha=alpha, r=r,
                        compute_dtype=jnp.bfloat16)
    y_bf = jax.block_until_ready(y_bf)
    assert jnp.allclose(y_bf, y_ref, atol=3e-2, rtol=3e-2), "bf16 mismatch vs reference"

    print("KERNEL_OK")
</pallas_src>

<mosaic_0001>
module attributes {stable_mosaic.version = 11 : i64} {
  func.func @_clora_kernel(%arg0: i32, %arg1: i32, %arg2: i32, %arg3: memref<16x128xf32, #tpu.memory_space<vmem>>, %arg4: memref<128x128xf32, #tpu.memory_space<vmem>>, %arg5: memref<16x32xf32, #tpu.memory_space<vmem>>, %arg6: memref<32x128xf32, #tpu.memory_space<vmem>>, %arg7: memref<1x128xf32, #tpu.memory_space<vmem>>, %arg8: memref<16x128xf32, #tpu.memory_space<vmem>>, %arg9: memref<16x128xf32, #tpu.memory_space<vmem>>) attributes {dimension_semantics = [#tpu.dimension_semantics<parallel>, #tpu.dimension_semantics<parallel>, #tpu.dimension_semantics<arbitrary>], iteration_bounds = array<i64: 1, 1, 1>, scalar_prefetch = 0 : i64, scratch_operands = 1 : i64, tpu.core_type = #tpu.core_type<tc>, window_params = [{transform_indices = @transform_0, window_bounds = array<i64: 16, 128>}, {transform_indices = @transform_1, window_bounds = array<i64: 128, 128>}, {transform_indices = @transform_2, window_bounds = array<i64: 16, 32>}, {transform_indices = @transform_3, window_bounds = array<i64: 32, 128>}, {transform_indices = @transform_4, window_bounds = array<i64: 1, 128>}, {transform_indices = @transform_5, window_bounds = array<i64: 16, 128>}]} {
    %c0_i32 = arith.constant 0 : i32
    %0 = arith.cmpi eq, %arg2, %c0_i32 : i32
    %1 = arith.extui %0 : i1 to i32
    %c0_i32_0 = arith.constant 0 : i32
    %2 = arith.cmpi ne, %1, %c0_i32_0 : i32
    scf.if %2 {
      %cst_10 = arith.constant 0.000000e+00 : f32
      %12 = vector.broadcast %cst_10 : f32 to vector<16x128xf32>
      %c0_11 = arith.constant 0 : index
      %c0_12 = arith.constant 0 : index
      %13 = vector.load %arg9[%c0_11, %c0_12] : memref<16x128xf32, #tpu.memory_space<vmem>>, vector<16x128xf32>
      tpu.vector_store %arg9[%c0_11, %c0_12], %12 {strides = array<i32>} : memref<16x128xf32, #tpu.memory_space<vmem>>, vector<16x128xf32>,
    } else {
    }
    %c0 = arith.constant 0 : index
    %c0_1 = arith.constant 0 : index
    %3 = vector.load %arg9[%c0, %c0_1] : memref<16x128xf32, #tpu.memory_space<vmem>>, vector<16x128xf32>
    %c0_2 = arith.constant 0 : index
    %c0_3 = arith.constant 0 : index
    %4 = vector.load %arg3[%c0_2, %c0_3] : memref<16x128xf32, #tpu.memory_space<vmem>>, vector<16x128xf32>
    %c0_4 = arith.constant 0 : index
    %c0_5 = arith.constant 0 : index
    %5 = vector.load %arg4[%c0_4, %c0_5] : memref<128x128xf32, #tpu.memory_space<vmem>>, vector<128x128xf32>
    %cst = arith.constant dense<0.000000e+00> : vector<16x128xf32>
    %6 = tpu.matmul %4, %5, %cst {dimension_numbers = #tpu.dot_dimension_numbers<[1], [1], [0], [0], [0, 0, 1, 0], [], []>} : vector<16x128xf32>, vector<128x128xf32>, vector<16x128xf32> -> vector<16x128xf32>
    %7 = arith.addf %3, %6 : vector<16x128xf32>
    %c0_6 = arith.constant 0 : index
    %c0_7 = arith.constant 0 : index
    %8 = vector.load %arg9[%c0_6, %c0_7] : memref<16x128xf32, #tpu.memory_space<vmem>>, vector<16x128xf32>
    tpu.vector_store %arg9[%c0_6, %c0_7], %7 {strides = array<i32>} : memref<16x128xf32, #tpu.memory_space<vmem>>, vector<16x128xf32>,
    %c0_i32_8 = arith.constant 0 : i32
    %9 = arith.cmpi eq, %arg2, %c0_i32_8 : i32
    %10 = arith.extui %9 : i1 to i32
    %c0_i32_9 = arith.constant 0 : i32
    %11 = arith.cmpi ne, %10, %c0_i32_9 : i32
    scf.if %11 {
      %c0_10 = arith.constant 0 : index
      %c0_11 = arith.constant 0 : index
      %12 = vector.load %arg5[%c0_10, %c0_11] : memref<16x32xf32, #tpu.memory_space<vmem>>, vector<16x32xf32>
      %c0_12 = arith.constant 0 : index
      %c0_13 = arith.constant 0 : index
      %13 = vector.load %arg6[%c0_12, %c0_13] : memref<32x128xf32, #tpu.memory_space<vmem>>, vector<32x128xf32>
      %cst_14 = arith.constant dense<0.000000e+00> : vector<16x128xf32>
      %14 = tpu.matmul %12, %13, %cst_14 {dimension_numbers = #tpu.dot_dimension_numbers<[1], [0], [0], [1], [0, 0, 1, 1], [], []>} : vector<16x32xf32>, vector<32x128xf32>, vector<16x128xf32> -> vector<16x128xf32>
      %c0_15 = arith.constant 0 : index
      %c0_16 = arith.constant 0 : index
      %15 = vector.load %arg9[%c0_15, %c0_16] : memref<16x128xf32, #tpu.memory_space<vmem>>, vector<16x128xf32>
      %16 = arith.addf %15, %14 : vector<16x128xf32>
      %c0_17 = arith.constant 0 : index
      %c0_18 = arith.constant 0 : index
      %17 = vector.load %arg7[%c0_17, %c0_18] : memref<1x128xf32, #tpu.memory_space<vmem>>, vector<1x128xf32>
      %18 = vector.broadcast %17 : vector<1x128xf32> to vector<16x128xf32>
      %19 = arith.addf %16, %18 : vector<16x128xf32>
      %c0_19 = arith.constant 0 : index
      %c0_20 = arith.constant 0 : index
      %20 = vector.load %arg8[%c0_19, %c0_20] : memref<16x128xf32, #tpu.memory_space<vmem>>, vector<16x128xf32>
      tpu.vector_store %arg8[%c0_19, %c0_20], %19 {strides = array<i32>} : memref<16x128xf32, #tpu.memory_space<vmem>>, vector<16x128xf32>,
    } else {
    }
    return
  }
  func.func @transform_0(%arg0: i32, %arg1: i32, %arg2: i32) -> (i32, i32) {
    %c0_i32 = arith.constant 0 : i32
    return %arg0, %arg2 : i32, i32
  }
  func.func @transform_1(%arg0: i32, %arg1: i32, %arg2: i32) -> (i32, i32) {
    %c0_i32 = arith.constant 0 : i32
    return %arg1, %arg2 : i32, i32
  }
  func.func @transform_2(%arg0: i32, %arg1: i32, %arg2: i32) -> (i32, i32) {
    %c0_i32 = arith.constant 0 : i32
    %c0_i32_0 = arith.constant 0 : i32
    return %arg0, %c0_i32 : i32, i32
  }
  func.func @transform_3(%arg0: i32, %arg1: i32, %arg2: i32) -> (i32, i32) {
    %c0_i32 = arith.constant 0 : i32
    %c0_i32_0 = arith.constant 0 : i32
    return %c0_i32, %arg1 : i32, i32
  }
  func.func @transform_4(%arg0: i32, %arg1: i32, %arg2: i32) -> (i32, i32) {
    %c0_i32 = arith.constant 0 : i32
    %c0_i32_0 = arith.constant 0 : i32
    return %c0_i32, %arg1 : i32, i32
  }
  func.func @transform_5(%arg0: i32, %arg1: i32, %arg2: i32) -> (i32, i32) {
    %c0_i32 = arith.constant 0 : i32
    return %arg0, %arg1 : i32, i32
  }
}

</mosaic_0001>

<llo_original>
// kernel: tpu_custom_call.1
$region0: #{tpu_custom_call.1}
  #allocation0 [shape = 'u32[]', space=smem, size = 0x4, offset = 0x4, fixed_abs, tag = 'smem constant byte address 0x4 - core index']
  #allocation1 [shape = 'u32[144,128]{1,0:T(1,128)}', space=vmem, size = 0x12000, scoped, tag = 'internal scratch']
  #allocation2 [shape = 'f32[16,128]{1,0:T(8,128)}', space=vmem, size = 0x2000, scoped, tag = 'scratch operand']
  %s0 = inlined_call_operand.hbm [shape: f32[16,128], index: 0, kind: input, shape index: {}]
  %s1 = inlined_call_operand.hbm [shape: f32[128,128], index: 1, kind: input, shape index: {}]
  %s2 = inlined_call_operand.hbm [shape: f32[16,32], index: 2, kind: input, shape index: {}]
  %s3 = inlined_call_operand.hbm [shape: f32[32,128], index: 3, kind: input, shape index: {}]
  %s4 = inlined_call_operand.vmem [shape: f32[1,128], index: 4, kind: input, shape index: {}]
  %s5 = inlined_call_operand.hbm [shape: f32[16,128], index: 5, kind: output, shape index: {}]
  %s6 = sld [smem:[#allocation0]]
  $region54: #{tpu_custom_call.1} parent=0
    _
  %s8 = ssub.s32 1, %s6
  %s9 = scalar_select 0, %s8, %s6
  $region1: #{tpu_custom_call.1} parent=0
    #allocation3 [shape = 'u8[8192]{0}', space=vmem, size = 0x2000, scoped, tag = 'input window, operand 0, single buffered']
    #allocation4 [shape = 's32[1]{0}', space=sflag, size = 0x4, scoped, tag = 'scoped memory for tpu_custom_call.1']
    #allocation5 [shape = 's32[1]{0}', space=sflag, size = 0x4, scoped, tag = 'scoped memory for tpu_custom_call.1']
    #allocation6 [shape = 'u8[65536]{0}', space=vmem, size = 0x10000, scoped, tag = 'input window, operand 1, single buffered']
    #allocation7 [shape = 's32[1]{0}', space=sflag, size = 0x4, scoped, tag = 'scoped memory for tpu_custom_call.1']
    #allocation8 [shape = 'u8[8192]{0}', space=vmem, size = 0x2000, scoped, tag = 'input window, operand 2, single buffered']
    #allocation9 [shape = 'u8[16384]{0}', space=vmem, size = 0x4000, scoped, tag = 'input window, operand 3, single buffered']
    #allocation10 [shape = 's32[1]{0}', space=sflag, size = 0x4, scoped, tag = 'scoped memory for tpu_custom_call.1']
    #allocation11 [shape = 'u8[8192]{0}', space=vmem, size = 0x2000, scoped, tag = 'output window, operand 0, single buffered']
    %10 = vsyncpa [#allocation4], 0
    %11 = vsyncpa [#allocation7], 0
    %12 = vsyncpa [#allocation10], 0
    %13 = vsyncpa [#allocation5], 0
    // Predicated region
    $region2: #{tpu_custom_call.1} parent=1 // pred_check
      _
    $region3: #{tpu_custom_call.1} parent=1 // pred_check_branch
      %15 = sbr.rel (0) target = $region5
    $region4: #{tpu_custom_call.1} parent=1 // pred_region
      %s17 = ssub.s32 256, 256
      %18 = vsyncadd [#allocation4], %s17
      %s19 = sshll.u32 [#allocation3], 4
      %s20 = int_to_ptr.vmem [resolvable:$true] %s19
      %25 = dma.hbm_to_vmem [thread:$0]  %s0, 256, %s20, [#allocation4], 128, 128, 8
    $region5: #{tpu_custom_call.1} parent=1 // pred_fallthru
      _
    // Predicated region
    $region6: #{tpu_custom_call.1} parent=1 // pred_check
      _
    $region7: #{tpu_custom_call.1} parent=1 // pred_check_branch
      %27 = sbr.rel (0) target = $region9
    $region8: #{tpu_custom_call.1} parent=1 // pred_region
      %s29 = ssub.s32 2048, 2048
      %30 = vsyncadd [#allocation7], %s29
      %s31 = sshll.u32 [#allocation6], 4
      %s32 = int_to_ptr.vmem [resolvable:$true] %s31
      %37 = dma.hbm_to_vmem [thread:$0]  %s1, 2048, %s32, [#allocation7], 128, 128, 8
    $region9: #{tpu_custom_call.1} parent=1 // pred_fallthru
      _
    // Predicated region
    $region10: #{tpu_custom_call.1} parent=1 // pred_check
      _
    $region11: #{tpu_custom_call.1} parent=1 // pred_check_branch
      %39 = sbr.rel (0) target = $region13
    $region12: #{tpu_custom_call.1} parent=1 // pred_region
      %s41 = ssub.s32 256, 256
      %42 = vsyncadd [#allocation7], %s41
      %s43 = sshll.u32 [#allocation8], 4
      %s44 = int_to_ptr.vmem [resolvable:$true] %s43
      %49 = dma.hbm_to_vmem [thread:$0]  %s2, 256, %s44, [#allocation7], 128, 128, 8
    $region13: #{tpu_custom_call.1} parent=1 // pred_fallthru
      _
    // Predicated region
    $region14: #{tpu_custom_call.1} parent=1 // pred_check
      _
    $region15: #{tpu_custom_call.1} parent=1 // pred_check_branch
      %51 = sbr.rel (0) target = $region17
    $region16: #{tpu_custom_call.1} parent=1 // pred_region
      %s53 = ssub.s32 512, 512
      %54 = vsyncadd [#allocation10], %s53
      %s55 = sshll.u32 [#allocation9], 4
      %s56 = int_to_ptr.vmem [resolvable:$true] %s55
      %61 = dma.hbm_to_vmem [thread:$0]  %s3, 512, %s56, [#allocation10], 128, 128, 8
    $region17: #{tpu_custom_call.1} parent=1 // pred_fallthru
      _
    // Predicated region
    $region18: #{tpu_custom_call.1} parent=1 // pred_check
      _
    $region19: #{tpu_custom_call.1} parent=1 // pred_check_branch
      %63 = sbr.rel (0) target = $region21
    $region20: #{tpu_custom_call.1} parent=1 // pred_region
      _
    $region21: #{tpu_custom_call.1} parent=1 // pred_fallthru
      _
    // Predicated region
    $region22: #{tpu_custom_call.1} parent=1 // pred_check
      _
    $region23: #{tpu_custom_call.1} parent=1 // pred_check_branch
      %65 = sbr.rel (0) target = $region25
    $region24: #{tpu_custom_call.1} parent=1 // pred_region
      %66 = dma.done [#allocation4], 256
    $region25: #{tpu_custom_call.1} parent=1 // pred_fallthru
      _
    // Predicated region
    $region26: #{tpu_custom_call.1} parent=1 // pred_check
      _
    $region27: #{tpu_custom_call.1} parent=1 // pred_check_branch
      %68 = sbr.rel (0) target = $region29
    $region28: #{tpu_custom_call.1} parent=1 // pred_region
      %69 = dma.done [#allocation7], 2048
    $region29: #{tpu_custom_call.1} parent=1 // pred_fallthru
      _
    // Predicated region
    $region30: #{tpu_custom_call.1} parent=1 // pred_check
      _
    $region31: #{tpu_custom_call.1} parent=1 // pred_check_branch
      %71 = sbr.rel (0) target = $region33
    $region32: #{tpu_custom_call.1} parent=1 // pred_region
      %72 = dma.done [#allocation7], 256
    $region33: #{tpu_custom_call.1} parent=1 // pred_fallthru
      _
    // Predicated region
    $region34: #{tpu_custom_call.1} parent=1 // pred_check
      _
    $region35: #{tpu_custom_call.1} parent=1 // pred_check_branch
      %74 = sbr.rel (0) target = $region37
    $region36: #{tpu_custom_call.1} parent=1 // pred_region
      %75 = dma.done [#allocation10], 512
    $region37: #{tpu_custom_call.1} parent=1 // pred_fallthru
      _
    %p76 = scmp.eq.s32.totalorder 0, 0
    // Predicated region
    $region38: #{tpu_custom_call.1} parent=1 // pred_check
      %p77 = pneg %p76
    $region39: #{tpu_custom_call.1} parent=1 // pred_check_branch
      %79 = sbr.rel (%p77) target = $region41
    $region40: #{tpu_custom_call.1} parent=1 // pred_region
      %80 = vst [vmem:[#allocation2] sm:$0xff] 0.0
      %81 = vst [vmem:[#allocation2 + $0x8] sm:$0xff] 0.0
    $region41: #{tpu_custom_call.1} parent=1 // pred_fallthru
      _
    %v82 = vld [vmem:[#allocation2] sm:$0xff]
    %v83 = vld [vmem:[#allocation2 + $0x8] sm:$0xff]
    %v84 = vld [vmem:[#allocation3] sm:$0xff]
    %v85 = vld [vmem:[#allocation3 + $0x8] sm:$0xff]
    %v86 = vld [vmem:[#allocation6] sm:$0xff]
    %v87 = vld [vmem:[#allocation6 + $0x8] sm:$0xff]
    %v88 = vld [vmem:[#allocation6 + $0x10] sm:$0xff]
    %v89 = vld [vmem:[#allocation6 + $0x18] sm:$0xff]
    %v90 = vld [vmem:[#allocation6 + $0x20] sm:$0xff]
    %v91 = vld [vmem:[#allocation6 + $0x28] sm:$0xff]
    %v92 = vld [vmem:[#allocation6 + $0x30] sm:$0xff]
    %v93 = vld [vmem:[#allocation6 + $0x38] sm:$0xff]
    %v94 = vld [vmem:[#allocation6 + $0x40] sm:$0xff]
    %v95 = vld [vmem:[#allocation6 + $0x48] sm:$0xff]
    %v96 = vld [vmem:[#allocation6 + $0x50] sm:$0xff]
    %v97 = vld [vmem:[#allocation6 + $0x58] sm:$0xff]
    %v98 = vld [vmem:[#allocation6 + $0x60] sm:$0xff]
    %v99 = vld [vmem:[#allocation6 + $0x68] sm:$0xff]
    %v100 = vld [vmem:[#allocation6 + $0x70] sm:$0xff]
    %v101 = vld [vmem:[#allocation6 + $0x78] sm:$0xff]
    %102 = vmatprep.subr.mxu0 0.0
    %103 = vmatpush1.xpose.msra.mxu0 %v86
    %104 = vmatprep.subr.mxu0 0.0
    %105 = vmatpush1.xpose.msra.mxu0 %v87
    %106 = vmatprep.subr.mxu0 0.0
    %107 = vmatpush1.xpose.msra.mxu0 %v88
    %108 = vmatprep.subr.mxu0 0.0
    %109 = vmatpush1.xpose.msra.mxu0 %v89
    %110 = vmatprep.subr.mxu0 0.0
    %111 = vmatpush1.xpose.msra.mxu0 %v90
    %112 = vmatprep.subr.mxu0 0.0
    %113 = vmatpush1.xpose.msra.mxu0 %v91
    %114 = vmatprep.subr.mxu0 0.0
    %115 = vmatpush1.xpose.msra.mxu0 %v92
    %116 = vmatprep.subr.mxu0 0.0
    %117 = vmatpush1.xpose.msra.mxu0 %v93
    %118 = vmatprep.subr.mxu0 0.0
    %119 = vmatpush1.xpose.msra.mxu0 %v94
    %120 = vmatprep.subr.mxu0 0.0
    %121 = vmatpush1.xpose.msra.mxu0 %v95
    %122 = vmatprep.subr.mxu0 0.0
    %123 = vmatpush1.xpose.msra.mxu0 %v96
    %124 = vmatprep.subr.mxu0 0.0
    %125 = vmatpush1.xpose.msra.mxu0 %v97
    %126 = vmatprep.subr.mxu0 0.0
    %127 = vmatpush1.xpose.msra.mxu0 %v98
    %128 = vmatprep.subr.mxu0 0.0
    %129 = vmatpush1.xpose.msra.mxu0 %v99
    %130 = vmatprep.subr.mxu0 0.0
    %131 = vmatpush1.xpose.msra.mxu0 %v100
    %132 = vmatprep.subr.mxu0 0.0
    %133 = vmatpush1.xpose.msra.mxu0 %v101
    %134 = vmatprep.subr.mxu0 0.0
    %135 = vmatpush1.xpose.msra.mxu0 0.0
    %136 = vmatprep.subr.mxu0 0.0
    %137 = vmatpush1.xpose.msra.mxu0 0.0
    %138 = vmatprep.subr.mxu0 0.0
    %139 = vmatpush1.xpose.msra.mxu0 0.0
    %140 = vmatprep.subr.mxu0 0.0
    %141 = vmatpush1.xpose.msra.mxu0 0.0
    %142 = vmatprep.subr.mxu0 0.0
    %143 = vmatpush1.xpose.msra.mxu0 0.0
    %144 = vmatprep.subr.mxu0 0.0
    %145 = vmatpush1.xpose.msra.mxu0 0.0
    %146 = vmatprep.subr.mxu0 0.0
    %147 = vmatpush1.xpose.msra.mxu0 0.0
    %148 = vmatprep.subr.mxu0 0.0
    %149 = vmatpush1.xpose.msra.mxu0 0.0
    %150 = vmatprep.subr.mxu0 0.0
    %151 = vmatpush1.xpose.msra.mxu0 0.0
    %152 = vmatprep.subr.mxu0 0.0
    %153 = vmatpush1.xpose.msra.mxu0 0.0
    %154 = vmatprep.subr.mxu0 0.0
    %155 = vmatpush1.xpose.msra.mxu0 0.0
    %156 = vmatprep.subr.mxu0 0.0
    %157 = vmatpush1.xpose.msra.mxu0 0.0
    %158 = vmatprep.subr.mxu0 0.0
    %159 = vmatpush1.xpose.msra.mxu0 0.0
    %160 = vmatprep.subr.mxu0 0.0
    %161 = vmatpush1.xpose.msra.mxu0 0.0
    %162 = vmatprep.subr.mxu0 0.0
    %163 = vmatpush1.xpose.msra.mxu0 0.0
    %164 = vmatprep.subr.mxu0 0.0
    %165 = vmatpush1.xpose.msra.mxu0 0.0
    %166 = vmatprep.mubr.f32.mxu0 0.0
    %167 = vmatmul.mubr.f32.gmra.mrb[0].mxu0 %v84
    %v168 = vpop.f32.mrb[0].mxu0
    %v169 = vadd.f32 0.0, %v168
    %v170 = vpop.f32.mrb[0].mxu0
    %171 = vmatprep.mubr.f32.mxu0 0.0
    %172 = vmatmul.mubr.f32.gmra.mrb[0].mxu0 %v85
    %v173 = vpop.f32.mrb[0].mxu0
    %v174 = vadd.f32 0.0, %v173
    %v175 = vpop.f32.mrb[0].mxu0
    %176 = vdwg.mxu0
    %v177 = vadd.f32 %v82, %v169
    %v178 = vadd.f32 %v83, %v174
    %179 = vst [vmem:[#allocation2] sm:$0xff] %v177
    %180 = vst [vmem:[#allocation2 + $0x8] sm:$0xff] %v178
    // Predicated region
    $region42: #{tpu_custom_call.1} parent=1 // pred_check
      %p181 = pneg %p76
    $region43: #{tpu_custom_call.1} parent=1 // pred_check_branch
      %183 = sbr.rel (%p181) target = $region45
    $region44: #{tpu_custom_call.1} parent=1 // pred_region
      %v184 = vld [vmem:[#allocation8] sm:$0xff]
      %v185 = vld [vmem:[#allocation8 + $0x8] sm:$0xff]
      %v186 = vld [vmem:[#allocation9] sm:$0xff]
      %v187 = vld [vmem:[#allocation9 + $0x8] sm:$0xff]
      %v188 = vld [vmem:[#allocation9 + $0x10] sm:$0xff]
      %v189 = vld [vmem:[#allocation9 + $0x18] sm:$0xff]
      %vm190 = vcmask 261120
      %v192 = vsel %vm190, %v184, 0
      %v195 = vsel %vm190, %v185, 0
      %197 = vmatprep.subr.mxu0 0.0
      %198 = vmatpush1.msra.mxu0 %v186
      %199 = vmatprep.subr.mxu0 0.0
      %200 = vmatpush1.msra.mxu0 %v187
      %201 = vmatprep.subr.mxu0 0.0
      %202 = vmatpush1.msra.mxu0 %v188
      %203 = vmatprep.subr.mxu0 0.0
      %204 = vmatpush1.msra.mxu0 %v189
      %205 = vmatprep.subr.mxu0 0.0
      %206 = vmatpush1.msra.mxu0 0.0
      %207 = vmatprep.subr.mxu0 0.0
      %208 = vmatpush1.msra.mxu0 0.0
      %209 = vmatprep.subr.mxu0 0.0
      %210 = vmatpush1.msra.mxu0 0.0
      %211 = vmatprep.subr.mxu0 0.0
      %212 = vmatpush1.msra.mxu0 0.0
      %213 = vmatprep.subr.mxu0 0.0
      %214 = vmatpush1.msra.mxu0 0.0
      %215 = vmatprep.subr.mxu0 0.0
      %216 = vmatpush1.msra.mxu0 0.0
      %217 = vmatprep.subr.mxu0 0.0
      %218 = vmatpush1.msra.mxu0 0.0
      %219 = vmatprep.subr.mxu0 0.0
      %220 = vmatpush1.msra.mxu0 0.0
      %221 = vmatprep.subr.mxu0 0.0
      %222 = vmatpush1.msra.mxu0 0.0
      %223 = vmatprep.subr.mxu0 0.0
      %224 = vmatpush1.msra.mxu0 0.0
      %225 = vmatprep.subr.mxu0 0.0
      %226 = vmatpush1.msra.mxu0 0.0
      %227 = vmatprep.subr.mxu0 0.0
      %228 = vmatpush1.msra.mxu0 0.0
      %229 = vmatprep.subr.mxu0 0.0
      %230 = vmatpush1.msra.mxu0 0.0
      %231 = vmatprep.subr.mxu0 0.0
      %232 = vmatpush1.msra.mxu0 0.0
      %233 = vmatprep.subr.mxu0 0.0
      %234 = vmatpush1.msra.mxu0 0.0
      %235 = vmatprep.subr.mxu0 0.0
      %236 = vmatpush1.msra.mxu0 0.0
      %237 = vmatprep.subr.mxu0 0.0
      %238 = vmatpush1.msra.mxu0 0.0
      %239 = vmatprep.subr.mxu0 0.0
      %240 = vmatpush1.msra.mxu0 0.0
      %241 = vmatprep.subr.mxu0 0.0
      %242 = vmatpush1.msra.mxu0 0.0
      %243 = vmatprep.subr.mxu0 0.0
      %244 = vmatpush1.msra.mxu0 0.0
      %245 = vmatprep.subr.mxu0 0.0
      %246 = vmatpush1.msra.mxu0 0.0
      %247 = vmatprep.subr.mxu0 0.0
      %248 = vmatpush1.msra.mxu0 0.0
      %249 = vmatprep.subr.mxu0 0.0
      %250 = vmatpush1.msra.mxu0 0.0
      %251 = vmatprep.subr.mxu0 0.0
      %252 = vmatpush1.msra.mxu0 0.0
      %253 = vmatprep.subr.mxu0 0.0
      %254 = vmatpush1.msra.mxu0 0.0
      %255 = vmatprep.subr.mxu0 0.0
      %256 = vmatpush1.msra.mxu0 0.0
      %257 = vmatprep.subr.mxu0 0.0
      %258 = vmatpush1.msra.mxu0 0.0
      %259 = vmatprep.subr.mxu0 0.0
      %260 = vmatpush1.msra.mxu0 0.0
      %261 = vmatprep.mubr.f32.mxu0 0.0
      %262 = vmatmul.mubr.f32.gmra.mrb[0].mxu0 %v192
      %v263 = vpop.f32.mrb[0].mxu0
      %v264 = vadd.f32 0.0, %v263
      %v265 = vpop.f32.mrb[0].mxu0
      %266 = vmatprep.mubr.f32.mxu0 0.0
      %267 = vmatmul.mubr.f32.gmra.mrb[0].mxu0 %v195
      %v268 = vpop.f32.mrb[0].mxu0
      %v269 = vadd.f32 0.0, %v268
      %v270 = vpop.f32.mrb[0].mxu0
      %271 = vdwg.mxu0
      %v272 = vld [vmem:[#allocation2] sm:$0xff]
      %v273 = vld [vmem:[#allocation2 + $0x8] sm:$0xff]
      %v274 = vadd.f32 %v272, %v264
      %v275 = vadd.f32 %v273, %v269
      %v276 = vld [vmem:[%s4] sm:$0x1]
      %v278 = vlaneseq
      %v279 = vshrl.u32 %v278, 7
      %v280 = vsub.s32 0, %v279
      %v281 = vrot.slane %v276, %v280
      %v283 = vadd.f32 %v274, %v281
      %v284 = vadd.f32 %v275, %v281
      %285 = vst [vmem:[#allocation11] sm:$0xff] %v283
      %286 = vst [vmem:[#allocation11 + $0x8] sm:$0xff] %v284
    $region45: #{tpu_custom_call.1} parent=1 // pred_fallthru
      _
    // Predicated region
    $region46: #{tpu_custom_call.1} parent=1 // pred_check
      _
    $region47: #{tpu_custom_call.1} parent=1 // pred_check_branch
      %288 = sbr.rel (0) target = $region49
    $region48: #{tpu_custom_call.1} parent=1 // pred_region
      %s290 = ssub.s32 256, 256
      %291 = vsyncadd [#allocation5], %s290
      %s292 = sshll.u32 [#allocation11], 4
      %s293 = int_to_ptr.vmem [resolvable:$true] %s292
      %298 = dma.vmem_to_hbm [thread:$0]  %s293, 256, %s5, [#allocation5], 128, 128, 8
    $region49: #{tpu_custom_call.1} parent=1 // pred_fallthru
      _
    // Predicated region
    $region50: #{tpu_custom_call.1} parent=1 // pred_check
      _
    $region51: #{tpu_custom_call.1} parent=1 // pred_check_branch
      %300 = sbr.rel (0) target = $region53
    $region52: #{tpu_custom_call.1} parent=1 // pred_region
      %301 = dma.done [#allocation5], 256
    $region53: #{tpu_custom_call.1} parent=1 // pred_fallthru
      _
    %302 = vsyncpa [#allocation4], 1
    %303 = vsyncpa [#allocation7], 1
    %304 = vsyncpa [#allocation10], 1
    %305 = vsyncpa [#allocation5], 1

</llo_original>
